<compile_context>
chip_gen: v7x
topology: tpu7x:2x2x1
jax: 0.10.0
libtpu: 0.0.40
codegen_flags: <defaults>
</compile_context>

<pallas_src>
import functools

import jax
import jax.numpy as jnp
from jax import lax
from jax.experimental import pallas as pl
from jax.experimental.pallas import tpu as pltpu


DEFAULT_MATMUL_DTYPE = jnp.bfloat16    # MXU-native operand dtype (f32 accumulate)


# -----------------------------------------------------------------------------
# Sizing helpers (generation-aware VMEM budget -> batch tile)
# -----------------------------------------------------------------------------
def _vmem_budget_bytes():
    """~3/4 of per-core VMEM (96 MiB on 128 MiB parts, 48 MiB on v7x)."""
    cap = 64 * 1024 * 1024
    try:
        info = pltpu.get_tpu_info()
        cap = int(getattr(info, "vmem_capacity_bytes", cap))
    except Exception:
        pass
    budget = (cap // 4) * 3
    return max(min(budget, 96 * 1024 * 1024), 32 * 1024 * 1024)


def _choose_block_n(n, per_row_bytes, fixed_bytes, budget_bytes, hard_cap):
    """Batch rows per grid step: fits the VMEM budget, keeps >=2 grid steps
    (so the 'parallel' axis actually shards across TensorCores), prefers an
    exact divisor of n so no padding is needed."""
    avail = max(budget_bytes - fixed_bytes, per_row_bytes)
    cap = int(avail // max(per_row_bytes, 1))
    cap = max(1, min(cap, hard_cap, n))
    if n >= 2:
        cap = min(cap, max(1, (n + 1) // 2))
    for b in range(cap, 0, -1):
        if n % b == 0:
            if 2 * b >= cap:
                return b
            break
    return cap          # no good divisor close to the cap -> pad the batch


def _pad_batch(x, n_pad):
    n = x.shape[0]
    if n == n_pad:
        return x
    return jnp.pad(x, [(0, n_pad - n)] + [(0, 0)] * (x.ndim - 1))


def _compiler_params(budget):
    # "parallel" batch axis -> shards grid across TensorCores on multi-TC chips.
    return pltpu.CompilerParams(
        dimension_semantics=("parallel",),
        vmem_limit_bytes=int(budget))


# -----------------------------------------------------------------------------
# Kernel 1 (eval path): base_module
#   global avg-pool over spatial -> (Bn,C) @ V -> L2-normalize -> cosine vs
#   pre-normalized seen_att -> * scale
# -----------------------------------------------------------------------------
def _base_module_kernel(scale_ref, feat_ref, v_ref, seen_t_ref, score_ref):
    feat = feat_ref[...]                          # (Bn, C, R)  matmul dtype
    v = v_ref[...]                                # (C, L)
    seen_t = seen_t_ref[...]                      # (L, S) pre-normalized, transposed

    # f32-accumulating pool (no explicit f32 copy of the tile).
    gfeat = jnp.mean(feat, axis=-1, dtype=jnp.float32)                 # (Bn, C)
    gs = jnp.dot(gfeat.astype(v.dtype), v,
                 preferred_element_type=jnp.float32)                   # (Bn, L)
    gs_n = gs / (jnp.sqrt(jnp.sum(gs * gs, axis=-1, keepdims=True)) + 1e-5)
    score = jnp.dot(gs_n.astype(seen_t.dtype), seen_t,
                    preferred_element_type=jnp.float32)                # (Bn, S)
    score_ref[:, 0, :] = score * scale_ref[0, 0]


# -----------------------------------------------------------------------------
# Kernel 2 (training path): base_module + attention + fused Reg/CPT reductions.
#   feat is streamed from HBM once per batch tile; only (N,S)/(N,L)-sized
#   tensors are written back (the (N,L,R) attention map never leaves VMEM).
#   Attention logits are computed as 2-D (L,C)@(C,R) matmuls per batch row
#   (statically unrolled) -> no (Bn,L,C) query broadcast, all dots 2-D.
# -----------------------------------------------------------------------------
def _train_fused_kernel(w_sp, scale_ref, feat_ref, query_ref, v_ref, seen_t_ref,
                        coords_ref, score_ref, attr_ref, cpt_ref):
    feat = feat_ref[...]                          # (Bn, C, R)  matmul dtype
    query = query_ref[...]                        # (L, C)      matmul dtype (hoisted)
    v = v_ref[...]                                # (C, L)
    seen_t = seen_t_ref[...]                      # (L, S)
    coords = coords_ref[...]                      # (3, R) f32: [h, w, h^2 + w^2]
    scale = scale_ref[0, 0]
    bn, _, r_sz = feat.shape

    # ---- base module (classification score) ----
    gfeat = jnp.mean(feat, axis=-1, dtype=jnp.float32)                 # (Bn, C)
    gs = jnp.dot(gfeat.astype(v.dtype), v,
                 preferred_element_type=jnp.float32)                   # (Bn, L)
    gs_n = gs / (jnp.sqrt(jnp.sum(gs * gs, axis=-1, keepdims=True)) + 1e-5)
    score = jnp.dot(gs_n.astype(seen_t.dtype), seen_t,
                    preferred_element_type=jnp.float32)                # (Bn, S)
    score_ref[:, 0, :] = score * scale

    rh = coords[0:1, :]                           # (1, R)
    rw = coords[1:2, :]
    rsq = coords[2:3, :]                          # h^2 + w^2 per position

    w_f = jnp.float32(w_sp)
    for b in range(bn):                           # statically unrolled over the tile
        fb = feat_ref[b]                          # (C, R) view of the resident block
        logits = jnp.dot(query, fb, preferred_element_type=jnp.float32)  # (L, R)

        # softmax over R; EUP reciprocal (+1 Newton step) on the tiny denominator.
        m = jnp.max(logits, axis=-1, keepdims=True)
        e = jnp.exp(logits - m)
        denom = jnp.sum(e, axis=-1, keepdims=True)
        inv = pl.reciprocal(denom, approx=True)
        inv = inv * (2.0 - denom * inv)
        a = e * inv                                                      # (L, R)

        # Reg-loss input: reuse the softmax max (single reduction).
        amax = jnp.max(a, axis=-1, keepdims=True)                        # (L, 1)
        attr_ref[b, :, :] = amax.T                                       # (1, L)

        # First-argmax spatial position, then the CPT sum in closed form
        # (no onehot / pos / a*pos full-size temporaries).
        r_pos = lax.broadcasted_iota(jnp.int32, a.shape, 1).astype(jnp.float32)
        first = jnp.min(jnp.where(a >= amax, r_pos, jnp.float32(r_sz)),
                        axis=-1, keepdims=True)                          # (L, 1)
        hstar = jnp.floor(first / w_f)
        wstar = first - w_f * hstar

        s_sq = jnp.sum(a * rsq, axis=-1, keepdims=True)
        s_h = jnp.sum(a * rh, axis=-1, keepdims=True)
        s_w = jnp.sum(a * rw, axis=-1, keepdims=True)
        cpt = s_sq - 2.0 * (hstar * s_h + wstar * s_w) \
            + hstar * hstar + wstar * wstar                              # (L, 1)
        cpt_ref[b, :, :] = cpt.T                                         # (1, L)


# -----------------------------------------------------------------------------
# Kernel 3 (getAttention path): one image per grid step (squeezed batch block).
#   part_feat comes out directly in the (L, C) PyTorch layout (normalized
#   in-kernel, no wrapper transpose), atten_map is written back in bf16.
# -----------------------------------------------------------------------------
def _attention_kernel(feat_ref, query_ref, pf_ref, amap_ref, attr_ref):
    fb = feat_ref[...]                            # (C, R)  matmul dtype
    query = query_ref[...]                        # (L, C)

    logits = jnp.dot(query, fb, preferred_element_type=jnp.float32)     # (L, R)
    m = jnp.max(logits, axis=-1, keepdims=True)
    e = jnp.exp(logits - m)
    denom = jnp.sum(e, axis=-1, keepdims=True)
    inv = pl.reciprocal(denom, approx=True)
    inv = inv * (2.0 - denom * inv)
    a = e * inv                                                          # (L, R)

    amap_ref[...] = a.astype(amap_ref.dtype)                             # bf16 writeback
    attr_ref[...] = jnp.max(a, axis=-1, keepdims=True).T                 # (1, L)

    # part_feat[l, c] = sum_r a[l, r] * feat[c, r]  (A @ B^T, 2-D, no transpose
    # of the big feat tile), then F.normalize over C.
    pf = lax.dot_general(a.astype(fb.dtype), fb,
                         dimension_numbers=(((1,), (1,)), ((), ())),
                         preferred_element_type=jnp.float32)             # (L, C)
    ssq = jnp.sum(pf * pf, axis=-1, keepdims=True)
    pf_ref[...] = pf * lax.rsqrt(jnp.maximum(ssq, 1e-24))


# -----------------------------------------------------------------------------
# Wrappers (pallas_call with a batch grid)
# -----------------------------------------------------------------------------
def base_module_pallas(feat3, V, seen_att, scale, *,
                       matmul_dtype=DEFAULT_MATMUL_DTYPE, block_n=None):
    N, C, R = feat3.shape
    S, L = seen_att.shape
    budget = _vmem_budget_bytes()
    isz = jnp.dtype(matmul_dtype).itemsize
    if block_n is None:
        # dbuf bf16 feat tile + (possible) f32 pooled-upcast + tiny outputs
        per_row = C * R * (2 * isz + 4) + S * 8
        fixed = (C * L + L * S) * isz
        block_n = _choose_block_n(N, per_row, fixed, budget, hard_cap=16)
    n_pad = -(-N // block_n) * block_n
    grid = (n_pad // block_n,)

    feat_q = _pad_batch(feat3.astype(matmul_dtype), n_pad)
    v_q = V.astype(matmul_dtype)
    seen_n = seen_att / (jnp.linalg.norm(seen_att, axis=1, keepdims=True) + 1e-5)
    seen_t = seen_n.T.astype(matmul_dtype)
    scale_arr = jnp.asarray(scale, jnp.float32).reshape(1, 1)

    cost = pl.CostEstimate(
        flops=int(n_pad * C * R + 2 * n_pad * C * L + 2 * n_pad * L * S),
        transcendentals=0,
        bytes_accessed=int(n_pad * C * R * isz + (C * L + L * S) * isz
                           + n_pad * S * 4))

    score3 = pl.pallas_call(
        _base_module_kernel,
        out_shape=jax.ShapeDtypeStruct((n_pad, 1, S), jnp.float32),
        grid=grid,
        in_specs=[
            pl.BlockSpec(memory_space=pltpu.MemorySpace.SMEM),           # scale
            pl.BlockSpec((block_n, C, R), lambda i: (i, 0, 0)),          # feat (pipelined)
            pl.BlockSpec((C, L), lambda i: (0, 0)),                      # V
            pl.BlockSpec((L, S), lambda i: (0, 0)),                      # seen_att (norm^T)
        ],
        out_specs=pl.BlockSpec((block_n, 1, S), lambda i: (i, 0, 0)),
        compiler_params=_compiler_params(budget),
        cost_estimate=cost,
    )(scale_arr, feat_q, v_q, seen_t)
    return score3[:N, 0, :]


def train_fused_pallas(feat3, query, V, seen_att, scale, spatial_hw, *,
                       matmul_dtype=DEFAULT_MATMUL_DTYPE, block_n=None):
    N, C, R = feat3.shape
    L = query.shape[0]
    S = seen_att.shape[0]
    H, Wsp = spatial_hw
    assert R == H * Wsp
    budget = _vmem_budget_bytes()
    isz = jnp.dtype(matmul_dtype).itemsize
    if block_n is None:
        # dbuf bf16 feat + f32 pooled-upcast + per-row softmax/CPT temps + outputs
        per_row = C * R * (2 * isz + 4) + 6 * L * R * 4 + (S + 2 * L) * 8
        fixed = (2 * L * C + L * S) * isz + 3 * R * 4
        # hard_cap bounds the static unroll of the per-row attention math.
        block_n = _choose_block_n(N, per_row, fixed, budget, hard_cap=8)
    n_pad = -(-N // block_n) * block_n
    grid = (n_pad // block_n,)

    feat_q = _pad_batch(feat3.astype(matmul_dtype), n_pad)
    query_q = query.astype(matmul_dtype)
    v_q = V.astype(matmul_dtype)
    seen_n = seen_att / (jnp.linalg.norm(seen_att, axis=1, keepdims=True) + 1e-5)
    seen_t = seen_n.T.astype(matmul_dtype)

    r = jnp.arange(R, dtype=jnp.int32)
    rh = (r // Wsp).astype(jnp.float32)
    rw = (r % Wsp).astype(jnp.float32)
    coords = jnp.stack([rh, rw, rh * rh + rw * rw], axis=0)              # (3, R)
    scale_arr = jnp.asarray(scale, jnp.float32).reshape(1, 1)

    cost = pl.CostEstimate(
        flops=int(2 * n_pad * L * C * R + n_pad * C * R + 2 * n_pad * C * L
                  + 2 * n_pad * L * S + 12 * n_pad * L * R),
        transcendentals=int(n_pad * L * R),
        bytes_accessed=int(n_pad * C * R * isz + (2 * L * C + L * S) * isz
                           + 3 * R * 4 + n_pad * (S + 2 * L) * 4))

    kernel = functools.partial(_train_fused_kernel, Wsp)
    score3, attr3, cpt3 = pl.pallas_call(
        kernel,
        out_shape=(jax.ShapeDtypeStruct((n_pad, 1, S), jnp.float32),
                   jax.ShapeDtypeStruct((n_pad, 1, L), jnp.float32),
                   jax.ShapeDtypeStruct((n_pad, 1, L), jnp.float32)),
        grid=grid,
        in_specs=[
            pl.BlockSpec(memory_space=pltpu.MemorySpace.SMEM),           # scale (SMEM scalar)
            pl.BlockSpec((block_n, C, R), lambda i: (i, 0, 0)),          # feat (pipelined)
            pl.BlockSpec((L, C), lambda i: (0, 0)),                      # query (hoisted)
            pl.BlockSpec((C, L), lambda i: (0, 0)),                      # V
            pl.BlockSpec((L, S), lambda i: (0, 0)),                      # seen_att (norm^T)
            pl.BlockSpec((3, R), lambda i: (0, 0)),                      # CPT coords
        ],
        out_specs=(pl.BlockSpec((block_n, 1, S), lambda i: (i, 0, 0)),
                   pl.BlockSpec((block_n, 1, L), lambda i: (i, 0, 0)),
                   pl.BlockSpec((block_n, 1, L), lambda i: (i, 0, 0))),
        compiler_params=_compiler_params(budget),
        cost_estimate=cost,
    )(scale_arr, feat_q, query_q, v_q, seen_t, coords)
    return score3[:N, 0, :], attr3[:N, 0, :], cpt3[:N, 0, :]


def attention_pallas(feat3, query, *, matmul_dtype=DEFAULT_MATMUL_DTYPE):
    N, C, R = feat3.shape
    L = query.shape[0]
    budget = _vmem_budget_bytes()
    isz = jnp.dtype(matmul_dtype).itemsize
    feat_q = feat3.astype(matmul_dtype)
    query_q = query.astype(matmul_dtype)

    cost = pl.CostEstimate(
        flops=int(4 * N * L * C * R + 8 * N * L * R + 3 * N * C * L),
        transcendentals=int(N * L * R),
        bytes_accessed=int(N * C * R * isz + L * C * isz
                           + N * (C * L * 4 + L * R * isz + L * 4)))

    # One image per grid step: outputs per step are (L,C)f32 + (L,R)bf16 blocks,
    # which keeps the pipelined VMEM footprint small on every generation.
    pf, amap, attr3 = pl.pallas_call(
        _attention_kernel,
        out_shape=(jax.ShapeDtypeStruct((N, L, C), jnp.float32),
                   jax.ShapeDtypeStruct((N, L, R), matmul_dtype),
                   jax.ShapeDtypeStruct((N, 1, L), jnp.float32)),
        grid=(N,),
        in_specs=[pl.BlockSpec((None, C, R), lambda i: (i, 0, 0)),
                  pl.BlockSpec((L, C), lambda i: (0, 0))],
        out_specs=(pl.BlockSpec((None, L, C), lambda i: (i, 0, 0)),
                   pl.BlockSpec((None, L, R), lambda i: (i, 0, 0)),
                   pl.BlockSpec((None, 1, L), lambda i: (i, 0, 0))),
        compiler_params=_compiler_params(budget),
        cost_estimate=cost,
    )(feat_q, query_q)
    return pf, amap, attr3[:, 0, :]


# -----------------------------------------------------------------------------
# Loss glue (tiny reductions, plain JAX)
# -----------------------------------------------------------------------------
def _cross_entropy(score, label):
    logp = jax.nn.log_softmax(score, axis=-1)
    return -jnp.mean(jnp.take_along_axis(logp, label[:, None], axis=1))


def _mse(a, b):
    return jnp.mean((a - b) ** 2)


def _attr_decorrelation(query, attr_group):
    loss = 0.0
    for key in attr_group:
        idx = jnp.asarray(attr_group[key])
        proto = query[idx]                                   # (g, C)
        channel_l2 = jnp.sqrt(jnp.sum(proto * proto, axis=0))
        loss = loss + jnp.mean(channel_l2)
    return loss / len(attr_group)


# -----------------------------------------------------------------------------
# Forward wrappers (mirror GEMNet.forward / getAttention on backbone features)
# -----------------------------------------------------------------------------
def gemnet_forward(feat_nchw, params, seen_att, att=None, label=None,
                   attr_group=None, training=False,
                   matmul_dtype=DEFAULT_MATMUL_DTYPE, block_n=None):
    N, C, H, W = feat_nchw.shape
    R = H * W
    feat3 = feat_nchw.reshape(N, C, R).astype(jnp.float32)
    scale = params["scale"]

    if not training:
        return base_module_pallas(feat3, params["V"], seen_att, scale,
                                  matmul_dtype=matmul_dtype, block_n=block_n)

    # query = w2v_att @ W is tiny -> hoisted out of the per-batch kernel work.
    query = jnp.dot(params["w2v"], params["W"], preferred_element_type=jnp.float32)

    score, atten_attr, cpt_sum = train_fused_pallas(
        feat3, query, params["V"], seen_att, scale, (H, W),
        matmul_dtype=matmul_dtype, block_n=block_n)

    Lcls = _cross_entropy(score, label)
    Lreg = _mse(atten_attr, att)
    Lad = (_attr_decorrelation(query, attr_group)
           if attr_group is not None else jnp.float32(0.0))
    # CPT: loss.reshape(N,-1).mean(-1).mean() == mean over (n,l) of per-(n,l) sums / R
    Lcpt = jnp.mean(cpt_sum) / R
    return {"Reg_loss": Lreg, "Cls_loss": Lcls, "AD_loss": Lad,
            "CPT_loss": Lcpt, "scale": scale}


def gemnet_get_attention(feat_nchw, params, matmul_dtype=DEFAULT_MATMUL_DTYPE):
    N, C, H, W = feat_nchw.shape
    feat3 = feat_nchw.reshape(N, C, H * W).astype(jnp.float32)
    query = jnp.dot(params["w2v"], params["W"], preferred_element_type=jnp.float32)
    part_feat, amap, attr = attention_pallas(feat3, query, matmul_dtype=matmul_dtype)
    return part_feat, amap.reshape(N, -1, H, W), attr, query


# -----------------------------------------------------------------------------
# Pure-JAX reference (mirrors the kernels' dtype choices for like-for-like check)
# -----------------------------------------------------------------------------
def _reference(feat_nchw, params, seen_att, att, label, attr_group,
               matmul_dtype=DEFAULT_MATMUL_DTYPE):
    N, C, H, W = feat_nchw.shape
    R = H * W
    md = matmul_dtype
    feat_q = feat_nchw.reshape(N, C, R).astype(md)
    v_q = params["V"].astype(md)
    seen_n = seen_att / (jnp.linalg.norm(seen_att, axis=1, keepdims=True) + 1e-5)
    seen_t = seen_n.T.astype(md)
    scale = params["scale"]

    gfeat = jnp.mean(feat_q.astype(jnp.float32), axis=-1)
    gs = jnp.dot(gfeat.astype(md), v_q, preferred_element_type=jnp.float32)
    gs_n = gs / (jnp.sqrt(jnp.sum(gs * gs, axis=-1, keepdims=True)) + 1e-5)
    score = jnp.dot(gs_n.astype(md), seen_t,
                    preferred_element_type=jnp.float32) * scale

    query = jnp.dot(params["w2v"], params["W"], preferred_element_type=jnp.float32)
    q_q = query.astype(md)
    logits = jnp.einsum('lc,ncr->nlr', q_q, feat_q,
                        preferred_element_type=jnp.float32)
    amap = jax.nn.softmax(logits, axis=-1)
    attr = jnp.max(amap, axis=-1)
    pf = jnp.einsum('nlr,ncr->nlc', amap.astype(md), feat_q,
                    preferred_element_type=jnp.float32)
    pf = pf / jnp.maximum(jnp.linalg.norm(pf, axis=-1, keepdims=True), 1e-12)

    idx = jnp.argmax(amap, axis=-1)
    th = (idx // W).astype(jnp.float32)
    tw = (idx % W).astype(jnp.float32)
    r = jnp.arange(R)
    rh = (r // W).astype(jnp.float32)
    rw = (r % W).astype(jnp.float32)
    pos = (rh[None, None, :] - th[..., None]) ** 2 \
        + (rw[None, None, :] - tw[..., None]) ** 2
    cpt = jnp.mean(jnp.sum(amap * pos, axis=-1)) / R

    losses = {"Reg_loss": _mse(attr, att),
              "Cls_loss": _cross_entropy(score, label),
              "AD_loss": _attr_decorrelation(query, attr_group),
              "CPT_loss": cpt}
    return score, losses, pf, amap, attr, query


if __name__ == "__main__":
    key = jax.random.PRNGKey(0)
    # Small shapes consistent with the module's forward (backbone feature map).
    N, C, H, W = 2, 32, 8, 8          # backbone feature map (N, C, H, W)
    L, Dw = 16, 32                    # attritube_num, w2v embedding dim
    cls_num, ucls_num = 10, 3
    S = cls_num - ucls_num            # seen classes
    scale = 20.0

    ks = jax.random.split(key, 7)
    feat = jax.random.normal(ks[0], (N, C, H, W), jnp.float32) * 0.3
    w2v = jax.random.normal(ks[1], (L, Dw), jnp.float32)
    Wmat = jax.random.normal(ks[2], (Dw, C), jnp.float32) * 0.1
    Vmat = jax.random.normal(ks[3], (C, L), jnp.float32)
    seen_att = jax.random.normal(ks[4], (S, L), jnp.float32)
    att = jax.random.uniform(ks[5], (N, L), jnp.float32)
    label = jax.random.randint(ks[6], (N,), 0, S)

    attr_group = {1: [0, 1, 2, 3], 2: [4, 5, 6, 7],
                  3: [8, 9, 10, 11], 4: [12, 13, 14, 15]}
    params = {"W": Wmat, "V": Vmat, "w2v": w2v, "scale": scale}

    # eval-mode forward (block_n auto-chosen: >=2 grid steps so the batch grid
    # actually iterates / shards)
    score = gemnet_forward(feat, params, seen_att, training=False)
    score = jax.block_until_ready(score)

    # training-mode forward (fused kernel: score + Reg + CPT reductions)
    losses = gemnet_forward(feat, params, seen_att, att=att, label=label,
                            attr_group=attr_group, training=True)
    losses = jax.block_until_ready(losses)

    # getAttention path (part features + full attention map)
    part_feat, amap4, atten_attr, query = gemnet_get_attention(feat, params)
    jax.block_until_ready((part_feat, amap4, atten_attr))

    # ---- validation against a like-for-like pure-JAX reference ----
    ref_score, ref_losses, ref_pf, ref_amap, ref_attr, ref_query = _reference(
        feat, params, seen_att, att, label, attr_group)

    def _check(name, a, b, atol=5e-3, rtol=5e-3):
        a = jnp.asarray(a, jnp.float32)
        b = jnp.asarray(b, jnp.float32)
        ok = bool(jnp.allclose(a, b, atol=atol, rtol=rtol))
        assert ok, f"{name} mismatch (max abs diff {float(jnp.max(jnp.abs(a - b)))})"

    _check("score", score, ref_score)
    for k in ("Reg_loss", "Cls_loss", "AD_loss", "CPT_loss"):
        _check(k, losses[k], ref_losses[k])
    _check("query", query, ref_query)
    _check("atten_map", amap4.reshape(N, L, -1), ref_amap)
    _check("atten_attr", atten_attr, ref_attr)
    _check("part_feat", part_feat, ref_pf)

    print("KERNEL_OK")
</pallas_src>

<mosaic_0001>
module attributes {stable_mosaic.version = 11 : i64} {
  func.func @_base_module_kernel(%arg0: i32, %arg1: memref<1x1xf32, #tpu.memory_space<smem>>, %arg2: memref<1x32x64xbf16, #tpu.memory_space<vmem>>, %arg3: memref<32x16xbf16, #tpu.memory_space<vmem>>, %arg4: memref<16x7xbf16, #tpu.memory_space<vmem>>, %arg5: memref<1x1x7xf32, #tpu.memory_space<vmem>>) attributes {dimension_semantics = [#tpu.dimension_semantics<parallel>], iteration_bounds = array<i64: 2>, scalar_prefetch = 0 : i64, scratch_operands = 0 : i64, tpu.core_type = #tpu.core_type<tc>, window_params = [{transform_indices = @transform_0, window_bounds = array<i64: 1, 1>}, {transform_indices = @transform_1, window_bounds = array<i64: 1, 32, 64>}, {pipeline_mode = #tpu.pipeline_mode<synchronous>, transform_indices = @transform_2, window_bounds = array<i64: 32, 16>}, {pipeline_mode = #tpu.pipeline_mode<synchronous>, transform_indices = @transform_3, window_bounds = array<i64: 16, 7>}, {transform_indices = @transform_4, window_bounds = array<i64: 1, 1, 7>}]} {
    %c0 = arith.constant 0 : index
    %c0_0 = arith.constant 0 : index
    %c0_1 = arith.constant 0 : index
    %0 = vector.load %arg2[%c0, %c0_0, %c0_1] : memref<1x32x64xbf16, #tpu.memory_space<vmem>>, vector<1x32x64xbf16>
    %c0_2 = arith.constant 0 : index
    %c0_3 = arith.constant 0 : index
    %1 = vector.load %arg3[%c0_2, %c0_3] : memref<32x16xbf16, #tpu.memory_space<vmem>>, vector<32x16xbf16>
    %c0_4 = arith.constant 0 : index
    %c0_5 = arith.constant 0 : index
    %2 = vector.load %arg4[%c0_4, %c0_5] : memref<16x7xbf16, #tpu.memory_space<vmem>>, vector<16x7xbf16>
    %3 = arith.extf %0 : vector<1x32x64xbf16> to vector<1x32x64xf32>
    %cst = arith.constant dense<0.000000e+00> : vector<1x32xf32>
    %4 = vector.multi_reduction <add>, %3, %cst [2] : vector<1x32x64xf32> to vector<1x32xf32>
    %cst_6 = arith.constant 6.400000e+01 : f32
    %5 = vector.broadcast %cst_6 : f32 to vector<1x32xf32>
    %6 = arith.divf %4, %5 : vector<1x32xf32>
    %7 = arith.truncf %6 : vector<1x32xf32> to vector<1x32xbf16>
    %cst_7 = arith.constant dense<0.000000e+00> : vector<1x16xf32>
    %8 = tpu.matmul %7, %1, %cst_7 {dimension_numbers = #tpu.dot_dimension_numbers<[1], [0], [0], [1], [0, 0, 1, 1], [], []>} : vector<1x32xbf16>, vector<32x16xbf16>, vector<1x16xf32> -> vector<1x16xf32>
    %9 = arith.mulf %8, %8 : vector<1x16xf32>
    %cst_8 = arith.constant dense<0.000000e+00> : vector<1xf32>
    %10 = vector.multi_reduction <add>, %9, %cst_8 [1] : vector<1x16xf32> to vector<1xf32>
    %11 = vector.shape_cast %10 : vector<1xf32> to vector<1x1xf32>
    %12 = math.sqrt %11 : vector<1x1xf32>
    %cst_9 = arith.constant 9.99999974E-6 : f32
    %13 = vector.broadcast %cst_9 : f32 to vector<1x1xf32>
    %14 = arith.addf %12, %13 : vector<1x1xf32>
    %15 = vector.broadcast %14 : vector<1x1xf32> to vector<1x16xf32>
    %16 = arith.divf %8, %15 : vector<1x16xf32>
    %17 = arith.truncf %16 : vector<1x16xf32> to vector<1x16xbf16>
    %cst_10 = arith.constant dense<0.000000e+00> : vector<1x7xf32>
    %18 = tpu.matmul %17, %2, %cst_10 {dimension_numbers = #tpu.dot_dimension_numbers<[1], [0], [0], [1], [0, 0, 1, 1], [], []>} : vector<1x16xbf16>, vector<16x7xbf16>, vector<1x7xf32> -> vector<1x7xf32>
    %c0_11 = arith.constant 0 : index
    %c0_12 = arith.constant 0 : index
    %19 = memref.load %arg1[%c0_11, %c0_12] : memref<1x1xf32, #tpu.memory_space<smem>>
    %20 = vector.broadcast %19 : f32 to vector<1x7xf32>
    %21 = arith.mulf %18, %20 : vector<1x7xf32>
    %c0_13 = arith.constant 0 : index
    %c0_14 = arith.constant 0 : index
    %c0_15 = arith.constant 0 : index
    %22 = vector.load %arg5[%c0_13, %c0_14, %c0_15] : memref<1x1x7xf32, #tpu.memory_space<vmem>>, vector<1x1x7xf32>
    %23 = vector.shape_cast %22 : vector<1x1x7xf32> to vector<1x7xf32>
    %24 = vector.shape_cast %21 : vector<1x7xf32> to vector<1x1x7xf32>
    tpu.vector_store %arg5[%c0_13, %c0_14, %c0_15], %24 {strides = array<i32>} : memref<1x1x7xf32, #tpu.memory_space<vmem>>, vector<1x1x7xf32>,
    return
  }
  func.func @transform_0(%arg0: i32) -> (i32, i32) {
    %c0_i32 = arith.constant 0 : i32
    %c0_i32_0 = arith.constant 0 : i32
    %c0_i32_1 = arith.constant 0 : i32
    return %c0_i32, %c0_i32_0 : i32, i32
  }
  func.func @transform_1(%arg0: i32) -> (i32, i32, i32) {
    %c0_i32 = arith.constant 0 : i32
    %c0_i32_0 = arith.constant 0 : i32
    %c0_i32_1 = arith.constant 0 : i32
    return %arg0, %c0_i32, %c0_i32_0 : i32, i32, i32
  }
  func.func @transform_2(%arg0: i32) -> (i32, i32) {
    %c0_i32 = arith.constant 0 : i32
    %c0_i32_0 = arith.constant 0 : i32
    %c0_i32_1 = arith.constant 0 : i32
    return %c0_i32, %c0_i32_0 : i32, i32
  }
  func.func @transform_3(%arg0: i32) -> (i32, i32) {
    %c0_i32 = arith.constant 0 : i32
    %c0_i32_0 = arith.constant 0 : i32
    %c0_i32_1 = arith.constant 0 : i32
    return %c0_i32, %c0_i32_0 : i32, i32
  }
  func.func @transform_4(%arg0: i32) -> (i32, i32, i32) {
    %c0_i32 = arith.constant 0 : i32
    %c0_i32_0 = arith.constant 0 : i32
    %c0_i32_1 = arith.constant 0 : i32
    return %arg0, %c0_i32, %c0_i32_0 : i32, i32, i32
  }
}

</mosaic_0001>

<llo_original>
// kernel: tpu_custom_call.1
$region0: #{tpu_custom_call.1}
  #allocation0 [shape = 'u32[]', space=smem, size = 0x4, offset = 0x4, fixed_abs, tag = 'smem constant byte address 0x4 - core index']
  #allocation1 [shape = 'u32[144,128]{1,0:T(1,128)}', space=vmem, size = 0x12000, scoped, tag = 'internal scratch']
  #allocation2 [shape = 'f32[1,1]{1,0:T(1,128)S(6)}', space=smem, size = 0x200, scoped, tag = 'scoped memory for tpu_custom_call.1']
  %s0 = inlined_call_operand.<no memory space> [shape: f32[1,1], index: 0, kind: input, shape index: {}]
  %s1 = inlined_call_operand.vmem [shape: bf16[2,32,64], index: 1, kind: input, shape index: {}]
  %s2 = inlined_call_operand.vmem [shape: bf16[32,16], index: 2, kind: input, shape index: {}]
  %s3 = inlined_call_operand.vmem [shape: bf16[16,7], index: 3, kind: input, shape index: {}]
  %s4 = inlined_call_operand.hbm [shape: f32[2,1,7], index: 4, kind: output, shape index: {}]
  %s5 = sld [smem:[#allocation0]]
  $region49: #{tpu_custom_call.1} parent=0
    _
  %s7 = ssub.s32 1, %s5
  %s8 = scalar_select 0, %s7, %s5
  %9 = sst [smem:[#allocation2]] %s0
  $region1: #{tpu_custom_call.1} parent=0
    #allocation3 [shape = 'u8[1024]{0}', space=vmem, size = 0x400, scoped, tag = 'output window, operand 0']
    #allocation4 [shape = 's32[2]{0}', space=sflag, size = 0x8, scoped, tag = 'scoped memory for tpu_custom_call.1']
    %10 = vsyncpa [#allocation4], 0
    %s11 = scalar_lea.sflag [#allocation4], 1
    %12 = vsyncpa %s11, 0
    loop: start=0, step=1, limit=4
    $region2: #{tpu_custom_call.1} parent=1 // loop_pre_header
      _
    $region3: #{tpu_custom_call.1} parent=1 // loop_header
      %s14 = sphi 0, %s18
      %p15 = scmp.ge.s32.totalorder %s14, 4
      %s22 = sphi 0, %s22
      %s24 = sphi 0, %s22
      %s25 = sphi 0, %s24
      %s39 = sphi 0, %s25
      %s45 = sphi 0, %s47
      %s48 = sphi 0, %s45
      %s49 = sphi 0, %s48
      %s65 = sphi 0, %s49
      %s69 = sphi 0, %s69
      %s71 = sphi 0, %s69
      %s72 = sphi 0, %s71
      %s86 = sphi 0, %s72
      %s90 = sphi 0, %s90
      %s92 = sphi 0, %s90
      %s93 = sphi 0, %s92
      %s107 = sphi 0, %s93
      %s113 = sphi 0, %s115
      %s116 = sphi 0, %s113
      %s117 = sphi 0, %s116
      %s133 = sphi 0, %s117
    $region4: #{tpu_custom_call.1} parent=1 // loop_header_branch
      %17 = sbr.rel (%p15) target = $region8
    $region5: #{tpu_custom_call.1} parent=1 // loop_body
      %s19 = ssub.s32 %s14, 1
      %s20 = ssub.s32 %s14, 2
      %s21 = sadd.s32 %s14, 1
      %s23 = sadd.s32 %s22, 1
      %p26 = scmp.eq.s32.totalorder %s14, 1
      %p27 = scmp.ne.s32.totalorder %s22, %s24
      %p28 = scmp.eq.s32.totalorder %s14, 0
      %p29 = por %p27, %p28
      %p30 = scmp.ne.s32.totalorder %s22, %s24
      %p31 = scmp.eq.s32.totalorder %s19, 1
      %p32 = por %p30, %p31
      %p33 = scmp.ne.s32.totalorder %s24, %s25
      %p34 = scmp.eq.s32.totalorder %s19, 0
      %p35 = por %p33, %p34
      %p36 = scmp.ne.s32.totalorder %s24, %s25
      %p37 = scmp.eq.s32.totalorder %s20, 1
      %p38 = por %p36, %p37
      %p40 = scmp.ne.s32.totalorder %s25, %s39
      %p41 = scmp.eq.s32.totalorder %s20, 0
      %p42 = por %p40, %p41
      %s43 = ssub.s32 %s14, %s21
      %p44 = scmp.eq.s32.totalorder %s43, 0
      %s46 = sadd.s32 %s45, 1
      %s47 = scalar_select %p44, %s45, %s46
      %p50 = pneg %p44
      %p51 = scmp.eq.s32.totalorder %s14, 1
      %p52 = por %p50, %p51
      %p53 = scmp.ne.s32.totalorder %s45, %s48
      %p54 = scmp.eq.s32.totalorder %s14, 0
      %p55 = por %p53, %p54
      %p56 = scmp.ne.s32.totalorder %s45, %s48
      %p57 = scmp.eq.s32.totalorder %s19, 1
      %p58 = por %p56, %p57
      %p59 = scmp.ne.s32.totalorder %s48, %s49
      %p60 = scmp.eq.s32.totalorder %s19, 0
      %p61 = por %p59, %p60
      %p62 = scmp.ne.s32.totalorder %s48, %s49
      %p63 = scmp.eq.s32.totalorder %s20, 1
      %p64 = por %p62, %p63
      %p66 = scmp.ne.s32.totalorder %s49, %s65
      %p67 = scmp.eq.s32.totalorder %s20, 0
      %p68 = por %p66, %p67
      %s70 = sadd.s32 %s69, 1
      %p73 = scmp.eq.s32.totalorder %s14, 1
      %p74 = scmp.ne.s32.totalorder %s69, %s71
      %p75 = scmp.eq.s32.totalorder %s14, 0
      %p76 = por %p74, %p75
      %p77 = scmp.ne.s32.totalorder %s69, %s71
      %p78 = scmp.eq.s32.totalorder %s19, 1
      %p79 = por %p77, %p78
      %p80 = scmp.ne.s32.totalorder %s71, %s72
      %p81 = scmp.eq.s32.totalorder %s19, 0
      %p82 = por %p80, %p81
      %p83 = scmp.ne.s32.totalorder %s71, %s72
      %p84 = scmp.eq.s32.totalorder %s20, 1
      %p85 = por %p83, %p84
      %p87 = scmp.ne.s32.totalorder %s72, %s86
      %p88 = scmp.eq.s32.totalorder %s20, 0
      %p89 = por %p87, %p88
      %s91 = sadd.s32 %s90, 1
      %p94 = scmp.eq.s32.totalorder %s14, 1
      %p95 = scmp.ne.s32.totalorder %s90, %s92
      %p96 = scmp.eq.s32.totalorder %s14, 0
      %p97 = por %p95, %p96
      %p98 = scmp.ne.s32.totalorder %s90, %s92
      %p99 = scmp.eq.s32.totalorder %s19, 1
      %p100 = por %p98, %p99
      %p101 = scmp.ne.s32.totalorder %s92, %s93
      %p102 = scmp.eq.s32.totalorder %s19, 0
      %p103 = por %p101, %p102
      %p104 = scmp.ne.s32.totalorder %s92, %s93
      %p105 = scmp.eq.s32.totalorder %s20, 1
      %p106 = por %p104, %p105
      %p108 = scmp.ne.s32.totalorder %s93, %s107
      %p109 = scmp.eq.s32.totalorder %s20, 0
      %p110 = por %p108, %p109
      %s111 = ssub.s32 %s14, %s21
      %p112 = scmp.eq.s32.totalorder %s111, 0
      %s114 = sadd.s32 %s113, 1
      %s115 = scalar_select %p112, %s113, %s114
      %p118 = pneg %p112
      %p119 = scmp.eq.s32.totalorder %s14, 1
      %p120 = por %p118, %p119
      %p121 = scmp.ne.s32.totalorder %s113, %s116
      %p122 = scmp.eq.s32.totalorder %s14, 0
      %p123 = por %p121, %p122
      %p124 = scmp.ne.s32.totalorder %s113, %s116
      %p125 = scmp.eq.s32.totalorder %s19, 1
      %p126 = por %p124, %p125
      %p127 = scmp.ne.s32.totalorder %s116, %s117
      %p128 = scmp.eq.s32.totalorder %s19, 0
      %p129 = por %p127, %p128
      %p130 = scmp.ne.s32.totalorder %s116, %s117
      %p131 = scmp.eq.s32.totalorder %s20, 1
      %p132 = por %p130, %p131
      %p134 = scmp.ne.s32.totalorder %s117, %s133
      %p135 = scmp.eq.s32.totalorder %s20, 0
      %p136 = por %p134, %p135
      %p137 = scmp.le.s32.totalorder 1, %s14
      %p138 = scmp.lt.s32.totalorder %s14, 3
      %p139 = pnand %p137, %p138
      %p140 = pneg %p139
      // Predicated region
      $region9: #{tpu_custom_call.1} parent=5 // pred_check
        _
      $region10: #{tpu_custom_call.1} parent=5 // pred_check_branch
        %142 = sbr.rel (%p139) target = $region12
      $region11: #{tpu_custom_call.1} parent=5 // pred_region
        %s143 = ssub.s32 %s14, 1
        // Predicated region
        $region13: #{tpu_custom_call.1} parent=11 // pred_check
          %p144 = pneg %p35
        $region14: #{tpu_custom_call.1} parent=11 // pred_check_branch
          %146 = sbr.rel (%p144) target = $region16
        $region15: #{tpu_custom_call.1} parent=11 // pred_region
          _
        $region16: #{tpu_custom_call.1} parent=11 // pred_fallthru
          _
        // Predicated region
        $region17: #{tpu_custom_call.1} parent=11 // pred_check
          %p147 = pneg %p82
        $region18: #{tpu_custom_call.1} parent=11 // pred_check_branch
          %149 = sbr.rel (%p147) target = $region20
        $region19: #{tpu_custom_call.1} parent=11 // pred_region
          _
        $region20: #{tpu_custom_call.1} parent=11 // pred_fallthru
          _
        // Predicated region
        $region21: #{tpu_custom_call.1} parent=11 // pred_check
          %p150 = pneg %p103
        $region22: #{tpu_custom_call.1} parent=11 // pred_check_branch
          %152 = sbr.rel (%p150) target = $region24
        $region23: #{tpu_custom_call.1} parent=11 // pred_region
          _
        $region24: #{tpu_custom_call.1} parent=11 // pred_fallthru
          _
      $region12: #{tpu_custom_call.1} parent=5 // pred_fallthru
        _
      %p153 = scmp.lt.s32.totalorder %s14, 2
      // Predicated region
      $region25: #{tpu_custom_call.1} parent=5 // pred_check
        %p154 = pneg %p153
      $region26: #{tpu_custom_call.1} parent=5 // pred_check_branch
        %156 = sbr.rel (%p154) target = $region28
      $region27: #{tpu_custom_call.1} parent=5 // pred_region
        // Predicated region
        $region29: #{tpu_custom_call.1} parent=27 // pred_check
          %p157 = pneg %p55
        $region30: #{tpu_custom_call.1} parent=27 // pred_check_branch
          %159 = sbr.rel (%p157) target = $region32
        $region31: #{tpu_custom_call.1} parent=27 // pred_region
          %p160 = scmp.lt.s32.totalorder %s14, 1
          %s161 = scalar_select %p160, %s14, 1
          %s162 = smul.addr %s161, 4
          %s163 = smul.addr %s162, 4
          %s164 = scalar_lea.vmem %s1, %s163
        $region32: #{tpu_custom_call.1} parent=27 // pred_fallthru
          _
      $region28: #{tpu_custom_call.1} parent=5 // pred_fallthru
        _
      %p165 = scmp.le.s32.totalorder 1, %s14
      %p166 = scmp.lt.s32.totalorder %s14, 3
      %p167 = pnand %p165, %p166
      %p168 = pneg %p167
      // Predicated region
      $region33: #{tpu_custom_call.1} parent=5 // pred_check
        _
      $region34: #{tpu_custom_call.1} parent=5 // pred_check_branch
        %170 = sbr.rel (%p167) target = $region36
      $region35: #{tpu_custom_call.1} parent=5 // pred_region
        %s171 = ssub.s32 %s14, 1
        %p172 = pneg %p35
        %p173 = pneg %p32
        %p174 = scmp.lt.s32.totalorder %s19, 1
        %s175 = scalar_select %p174, %s19, 1
        %s176 = smul.addr %s175, 4
        %s177 = smul.addr %s176, 4
        %s178 = scalar_lea.vmem %s1, %s177
        %p179 = pneg %p61
        %p180 = pneg %p58
        %p181 = pneg %p82
        %p182 = pneg %p79
        %p183 = pneg %p103
        %p184 = pneg %p100
        %p185 = pneg %p129
        %p186 = pneg %p126
        %s187 = sand.u32 %s116, 1
        %s188 = scalar_lea.sflag [#allocation4], %s187
        %s189 = sand.u32 %s116, 1
        %s190 = scalar_lea.vmem [#allocation3], %s189
        %p191 = scmp.lt.s32.totalorder %s19, 1
        %s192 = scalar_select %p191, %s19, 1
        %s193 = smul.addr %s192, 4
        %s194 = smul.addr %s193, 4
        %s195 = scalar_lea.vmem %s1, %s194
        %v197 = vld [vmem:[%s195] sm:$0xf]
        %v198 = vld [vmem:[%s195 + $0x4] sm:$0xf]
        %v199 = vld [vmem:[%s195 + $0x8] sm:$0xf]
        %v200 = vld [vmem:[%s195 + $0xc] sm:$0xf]
        %v201 = vld [vmem:[%s2] sm:$0xf]
        %v202 = vld [vmem:[%s2 + $0x4] sm:$0xf]
        %v203 = vld [vmem:[%s2 + $0x8] sm:$0xf]
        %v204 = vld [vmem:[%s2 + $0xc] sm:$0xf]
        %v205 = vld [vmem:[%s3] sm:$0xf]
        %v206 = vld [vmem:[%s3 + $0x4] sm:$0xf]
        %v207 = vunpack.c.l.bf16 %v197
        %v208 = vunpack.c.l.bf16 %v198
        %v209 = vunpack.c.l.bf16 %v199
        %v210 = vunpack.c.l.bf16 %v200
        %vm211 = vcmask 523264
        %v212 = vsel %vm211, %v207, 0.0
        %213 = vadd.xlane.f32.xlu0 %v212
        %v214 = vpop.xlane.xlu0 %213
        %v215 = vsel %vm211, %v208, 0.0
        %216 = vadd.xlane.f32.xlu0 %v215
        %v217 = vpop.xlane.xlu0 %216
        %v218 = vsel %vm211, %v209, 0.0
        %219 = vadd.xlane.f32.xlu0 %v218
        %v220 = vpop.xlane.xlu0 %219
        %v221 = vsel %vm211, %v210, 0.0
        %222 = vadd.xlane.f32.xlu0 %v221
        %v223 = vpop.xlane.xlu0 %222
        %v224 = vrcp.pop 64.0
        %v225 = vmul.f32 %v214, %v224
        %v226 = vmul.f32 %v217, %v224
        %v227 = vmul.f32 %v220, %v224
        %v228 = vmul.f32 %v223, %v224
        %v229 = vpack.c.bf16 %v226, %v225
        %v230 = vpack.c.bf16 %v228, %v227
        %v233 = vunpack.c.l.b16 %v229
        %v234 = vunpack.c.h.b16 %v229
        %v235 = vunpack.c.l.b16 %v230
        %v236 = vunpack.c.h.b16 %v230
        %v237 = vlaneseq
        %v238 = vand.u32 %v237, 127
        %v239 = vlaneseq
        %v240 = vshrl.u32 %v239, 7
        %v241 = vsub.s32 %v238, %v240
        %v242 = vrot.slane %v233, %v241
        %v243 = vadd.s32 %v238, 4294967288
        %v244 = vlaneseq
        %v245 = vshrl.u32 %v244, 7
        %v246 = vsub.s32 %v243, %v245
        %v247 = vrot.slane %v234, %v246
        %vm248 = vcmask 130112
        %v249 = vsel %vm248, %v247, %v242
        %v250 = vadd.s32 %v238, 4294967280
        %v251 = vlaneseq
        %v252 = vshrl.u32 %v251, 7
        %v253 = vsub.s32 %v250, %v252
        %v254 = vrot.slane %v235, %v253
        %vm255 = vcmask 195712
        %v256 = vsel %vm255, %v254, %v249
        %v257 = vadd.s32 %v238, 4294967272
        %v258 = vlaneseq
        %v259 = vshrl.u32 %v258, 7
        %v260 = vsub.s32 %v257, %v259
        %v261 = vrot.slane %v236, %v260
        %vm262 = vcmask 261312
        %v263 = vsel %vm262, %v261, %v256
        %v264 = vpack.c.b16 %v263, %v263
        %v269 = vunpack.c.l.b16 %v201
        %v270 = vunpack.c.l.b16 %v202
        %v271 = vunpack.c.l.b16 %v203
        %v272 = vunpack.c.l.b16 %v204
        %v273 = vpack.c.b16 %v270, %v269
        %v274 = vpack.c.b16 %v272, %v271
        %vm277 = vcmask 261120
        %v279 = vsel %vm277, %v264, 0
        %281 = vmatprep.subr.bf16.mxu0 0
        %282 = vmatpush1.bf16.msra.mxu0 %v273
        %283 = vmatprep.subr.bf16.mxu0 0
        %284 = vmatpush1.bf16.msra.mxu0 %v274
        %285 = vmatprep.subr.bf16.mxu0 0
        %286 = vmatpush1.bf16.msra.mxu0 0
        %287 = vmatprep.subr.bf16.mxu0 0
        %288 = vmatpush1.bf16.msra.mxu0 0
        %289 = vmatprep.subr.bf16.mxu0 0
        %290 = vmatpush1.bf16.msra.mxu0 0
        %291 = vmatprep.subr.bf16.mxu0 0
        %292 = vmatpush1.bf16.msra.mxu0 0
        %293 = vmatprep.subr.bf16.mxu0 0
        %294 = vmatpush1.bf16.msra.mxu0 0
        %295 = vmatprep.subr.bf16.mxu0 0
        %296 = vmatpush1.bf16.msra.mxu0 0
        %297 = vmatprep.subr.bf16.mxu0 0
        %298 = vmatpush1.bf16.msra.mxu0 0
        %299 = vmatprep.subr.bf16.mxu0 0
        %300 = vmatpush1.bf16.msra.mxu0 0
        %301 = vmatprep.subr.bf16.mxu0 0
        %302 = vmatpush1.bf16.msra.mxu0 0
        %303 = vmatprep.subr.bf16.mxu0 0
        %304 = vmatpush1.bf16.msra.mxu0 0
        %305 = vmatprep.subr.bf16.mxu0 0
        %306 = vmatpush1.bf16.msra.mxu0 0
        %307 = vmatprep.subr.bf16.mxu0 0
        %308 = vmatpush1.bf16.msra.mxu0 0
        %309 = vmatprep.subr.bf16.mxu0 0
        %310 = vmatpush1.bf16.msra.mxu0 0
        %311 = vmatprep.subr.bf16.mxu0 0
        %312 = vmatpush1.bf16.msra.mxu0 0
        %313 = vmatprep.mubr.bf16.mxu0 0
        %314 = vmatmul.mubr.bf16.gmra.mrb[0].mxu0 %v279
        %v315 = vpop.f32.mrb[0].mxu0
        %v316 = vadd.f32 0.0, %v315
        %v317 = vpop.f32.mrb[0].mxu0
        %v318 = vpop.f32.mrb[0].mxu0
        %v319 = vpop.f32.mrb[0].mxu0
        %320 = vdwg.mxu0
        %v321 = vmul.f32 %v316, %v316
        %vm322 = vcmask 122880
        %v323 = vsel %vm322, %v321, 0.0
        %324 = vadd.xlane.f32.xlu0 %v323
        %v325 = vpop.xlane.xlu0 %324
        %v326 = vrsqrt.pop %v325
        %v327 = vmul.f32 %v325, %v326
        %vm328 = vcmp.eq.f32.partialorder %v325, inf
        %v329 = vsel %vm328, %v325, %v327
        %vm330 = vcmp.eq.f32.partialorder %v325, 0.0
        %v331 = vand.u32 %v325, 2147483648
        %v332 = vsel %vm330, %v331, %v329
        %v333 = vadd.f32 %v332, 1e-05
        %v334 = vrcp.pop %v333
        %v335 = vmul.f32 %v316, %v334
        %v336 = vpack.c.bf16 %v335, %v335
        %v339 = vunpack.c.l.b16 %v205
        %v340 = vunpack.c.l.b16 %v206
        %v341 = vpack.c.b16 %v340, %v339
        %vm343 = vcmask 130048
        %v345 = vsel %vm343, %v336, 0
        %347 = vmatprep.subr.bf16.mxu0 0
        %348 = vmatpush1.bf16.msra.mxu0 %v341
        %349 = vmatprep.subr.bf16.mxu0 0
        %350 = vmatpush1.bf16.msra.mxu0 0
        %351 = vmatprep.subr.bf16.mxu0 0
        %352 = vmatpush1.bf16.msra.mxu0 0
        %353 = vmatprep.subr.bf16.mxu0 0
        %354 = vmatpush1.bf16.msra.mxu0 0
        %355 = vmatprep.subr.bf16.mxu0 0
        %356 = vmatpush1.bf16.msra.mxu0 0
        %357 = vmatprep.subr.bf16.mxu0 0
        %358 = vmatpush1.bf16.msra.mxu0 0
        %359 = vmatprep.subr.bf16.mxu0 0
        %360 = vmatpush1.bf16.msra.mxu0 0
        %361 = vmatprep.subr.bf16.mxu0 0
        %362 = vmatpush1.bf16.msra.mxu0 0
        %363 = vmatprep.subr.bf16.mxu0 0
        %364 = vmatpush1.bf16.msra.mxu0 0
        %365 = vmatprep.subr.bf16.mxu0 0
        %366 = vmatpush1.bf16.msra.mxu0 0
        %367 = vmatprep.subr.bf16.mxu0 0
        %368 = vmatpush1.bf16.msra.mxu0 0
        %369 = vmatprep.subr.bf16.mxu0 0
        %370 = vmatpush1.bf16.msra.mxu0 0
        %371 = vmatprep.subr.bf16.mxu0 0
        %372 = vmatpush1.bf16.msra.mxu0 0
        %373 = vmatprep.subr.bf16.mxu0 0
        %374 = vmatpush1.bf16.msra.mxu0 0
        %375 = vmatprep.subr.bf16.mxu0 0
        %376 = vmatpush1.bf16.msra.mxu0 0
        %377 = vmatprep.subr.bf16.mxu0 0
        %378 = vmatpush1.bf16.msra.mxu0 0
        %379 = vmatprep.mubr.bf16.mxu0 0
        %380 = vmatmul.mubr.bf16.gmra.mrb[0].mxu0 %v345
        %v381 = vpop.f32.mrb[0].mxu0
        %v382 = vadd.f32 0.0, %v381
        %v383 = vpop.f32.mrb[0].mxu0
        %v384 = vpop.f32.mrb[0].mxu0
        %v385 = vpop.f32.mrb[0].mxu0
        %386 = vdwg.mxu0
        %s387 = sld [smem:[#allocation2]]
        %v388 = vstv %s387
        %v389 = vmul.f32 %v382, %v388
        %vm390 = vcmask 49152
        %391 = vst.msk [vmem:[%s190] sm:$0x1] %vm390, %v389
        %s392 = sand.u32 %s116, 1
        %s393 = scalar_lea.sflag [#allocation4], %s392
        %s394 = sand.u32 %s116, 1
        %s395 = scalar_lea.vmem [#allocation3], %s394
        // Predicated region
        $region37: #{tpu_custom_call.1} parent=35 // pred_check
          %p396 = pneg %p126
        $region38: #{tpu_custom_call.1} parent=35 // pred_check_branch
          %398 = sbr.rel (%p396) target = $region40
        $region39: #{tpu_custom_call.1} parent=35 // pred_region
          %s400 = ssub.s32 16, 16
          %401 = vsyncadd %s393, %s400
          %s402 = smul.addr %s19, 16
          %s403 = scalar_lea.hbm %s4, %s402
          %s405 = sshll.u32 %s395, 4
          %s406 = int_to_ptr.vmem [resolvable:$true] %s405
          %408 = dma.vmem_to_hbm [thread:$0]  %s406, 16, %s403, %s393
        $region40: #{tpu_custom_call.1} parent=35 // pred_fallthru
          _
      $region36: #{tpu_custom_call.1} parent=5 // pred_fallthru
        _
      %p409 = scmp.le.s32.totalorder 2, %s14
      // Predicated region
      $region41: #{tpu_custom_call.1} parent=5 // pred_check
        %p410 = pneg %p409
      $region42: #{tpu_custom_call.1} parent=5 // pred_check_branch
        %412 = sbr.rel (%p410) target = $region44
      $region43: #{tpu_custom_call.1} parent=5 // pred_region
        %s413 = ssub.s32 %s14, 2
        // Predicated region
        $region45: #{tpu_custom_call.1} parent=43 // pred_check
          %p414 = pneg %p132
        $region46: #{tpu_custom_call.1} parent=43 // pred_check_branch
          %416 = sbr.rel (%p414) target = $region48
        $region47: #{tpu_custom_call.1} parent=43 // pred_region
          %s417 = sand.u32 %s117, 1
          %s418 = scalar_lea.sflag [#allocation4], %s417
          %s419 = sand.u32 %s117, 1
          %s420 = scalar_lea.vmem [#allocation3], %s419
          %421 = dma.done %s418, 16
        $region48: #{tpu_custom_call.1} parent=43 // pred_fallthru
          _
      $region44: #{tpu_custom_call.1} parent=5 // pred_fallthru
        _
    $region6: #{tpu_custom_call.1} parent=1 // loop_footer
      %s18 = sadd.s32 1, %s14
    $region7: #{tpu_custom_call.1} parent=1 // loop_footer_branch
      %13 = sbr.rel target = $region3
    $region8: #{tpu_custom_call.1} parent=1 // loop_exit
      _
    %422 = vsyncpa [#allocation4], 1
    %s423 = scalar_lea.sflag [#allocation4], 1
    %424 = vsyncpa %s423, 1

</llo_original>
